<compile_context>
chip_gen: v7x
topology: tpu7x:2x2x1
jax: 0.10.0
libtpu: 0.0.40
codegen_flags: <defaults>
</compile_context>

<pallas_src>
import jax
import jax.numpy as jnp
from jax.experimental import pallas as pl
from jax.experimental.pallas import tpu as pltpu

EPS = 1e-6


def _round_up(n, m):
    return ((n + m - 1) // m) * m


def _vmem_capacity_bytes():
    """Per-core VMEM capacity; conservative fallback if the query fails."""
    try:
        return int(pltpu.get_tpu_info().vmem_capacity_bytes)
    except Exception:
        return 64 << 20  # v7x per-TC capacity (smallest of the three gens)


def sublayer_connection_kernel(x_ref, a2_ref, b2_ref, w_ref, bsub_ref, o_ref):
    x = x_ref[...].astype(jnp.float32)           # (TM, D)
    a2 = a2_ref[...].astype(jnp.float32)         # (1, D)
    b2 = b2_ref[...].astype(jnp.float32)         # (1, D)
    bsub = bsub_ref[...].astype(jnp.float32)     # (1, D)

    d = x.shape[-1]

    # --- torch-style LayerNorm: two-pass centered variance (unbiased),
    #     eps added to std.  Kernel is HBM-bound, so the serialized second
    #     reduction is free and avoids cancellation for large-mean inputs. ---
    mean = jnp.sum(x, axis=-1, keepdims=True) * (1.0 / d)
    centered = x - mean
    var_unbiased = jnp.sum(centered * centered, axis=-1, keepdims=True) * (1.0 / (d - 1))
    std = jnp.sqrt(var_unbiased)
    inv = pl.reciprocal(std + EPS, approx=True)          # EUP slot, per-row
    normed = centered * inv * a2 + b2

    # --- sublayer: Linear(size, size) on the MXU.  Matmul dtype follows the
    #     caller-provided weight dtype (bf16 recommended), f32 accumulation. ---
    sub = jnp.dot(normed.astype(w_ref.dtype), w_ref[...],
                  preferred_element_type=jnp.float32) + bsub

    # --- dropout (eval mode = identity) + residual add.  Re-read the tile
    #     from VMEM so the f32 x temp is not live across the matmul. ---
    o_ref[...] = (x_ref[...].astype(jnp.float32) + sub).astype(o_ref.dtype)


def sublayer_connection(x, a2, b2, w, bsub, *,
                        target_tile_bytes=4 << 20, max_tm=4096):
    """x: (B, S, D).  a2, b2, bsub: (D,).  w: (D, D) laid out as y = n @ w.

    Pass w pre-cast to bf16 (done once by the caller) for MXU-native matmul;
    pass x in bf16 to stream I/O at half the HBM bytes (math stays f32).
    """
    B, S, D = x.shape
    N = B * S
    x2 = x.reshape(N, D)

    # Tiny pad only if N isn't sublane-aligned (< 8 extra rows).  The old
    # "pad N up to a multiple of TM" full-tensor pad + slice is gone.
    n_rows = N
    padded = False
    if N % 8 != 0:
        n_rows = _round_up(N, 8)
        x2 = jnp.pad(x2, ((0, n_rows - N), (0, 0)))
        padded = True

    # --- adaptive row tile: ~target_tile_bytes of input per grid step ---
    itemsize = jnp.dtype(x2.dtype).itemsize
    tm = (target_tile_bytes // (D * itemsize)) // 8 * 8
    tm = int(max(8, min(tm, max_tm, n_rows)))
    # Keep >= 2 grid steps when there is enough work (v7x megacore sharding).
    if n_rows >= 1024 and pl.cdiv(n_rows, tm) < 2:
        tm = max(512, _round_up(pl.cdiv(n_rows, 2), 8))
    grid = (pl.cdiv(n_rows, tm),)

    # --- generation-aware VMEM limit derived from the actual tile budget ---
    w_itemsize = jnp.dtype(w.dtype).itemsize
    est = (2 * tm * D * itemsize             # x tile, double buffered
           + 2 * tm * D * itemsize           # out tile, double buffered
           + 2 * D * D * w_itemsize          # resident weight (double buffered)
           + 8 * D * 4                       # a2 / b2 / bsub
           + (4 << 20))                      # headroom (internal scratch, etc.)
    vmem_cap = _vmem_capacity_bytes()
    vmem_limit = int(min(max(est, 16 << 20), (vmem_cap * 3) // 4))

    out = pl.pallas_call(
        sublayer_connection_kernel,
        out_shape=jax.ShapeDtypeStruct((n_rows, D), x.dtype),
        grid_spec=pltpu.PrefetchScalarGridSpec(
            num_scalar_prefetch=0,
            grid=grid,
            in_specs=[
                pl.BlockSpec((tm, D), lambda i: (i, 0)),   # x: row-tiled
                pl.BlockSpec((1, D), lambda i: (0, 0)),    # a2: resident
                pl.BlockSpec((1, D), lambda i: (0, 0)),    # b2: resident
                pl.BlockSpec((D, D), lambda i: (0, 0)),    # w : resident
                pl.BlockSpec((1, D), lambda i: (0, 0)),    # bsub: resident
            ],
            out_specs=pl.BlockSpec((tm, D), lambda i: (i, 0)),
        ),
        compiler_params=pltpu.CompilerParams(
            dimension_semantics=("parallel",),
            vmem_limit_bytes=vmem_limit,
        ),
    )(x2, a2.reshape(1, D), b2.reshape(1, D), w, bsub.reshape(1, D))

    if padded:
        out = out[:N]
    return out.reshape(B, S, D)


def _reference(x, a2, b2, w, bsub):
    """Pure-JAX f32 reference mirroring the PyTorch module (eval dropout)."""
    d = x.shape[-1]
    mean = jnp.mean(x, axis=-1, keepdims=True)
    centered = x - mean
    var_unbiased = jnp.sum(centered * centered, axis=-1, keepdims=True) / (d - 1)
    std = jnp.sqrt(var_unbiased)
    normed = a2 * centered / (std + EPS) + b2
    sub = normed @ w + bsub
    return x + sub


if __name__ == "__main__":
    B, S, D = 2, 8, 128  # batch=2, seq=8, hidden/size=128 (lane-friendly)

    key = jax.random.PRNGKey(0)
    kx, kw, kb = jax.random.split(key, 3)

    x = jax.random.normal(kx, (B, S, D), dtype=jnp.float32)

    # LayerNorm params exactly as in __init__: ones / zeros.
    a2 = jnp.ones((D,), dtype=jnp.float32)
    b2 = jnp.zeros((D,), dtype=jnp.float32)

    # Deterministic Linear(size, size) standing in for the `sublayer` callable.
    w = jax.random.normal(kw, (D, D), dtype=jnp.float32) * 0.02
    bsub = jax.random.normal(kb, (D,), dtype=jnp.float32) * 0.02

    # bf16 weight cast hoisted out of the wrapper: cast once, reuse per call.
    w_bf16 = w.astype(jnp.bfloat16)

    out = sublayer_connection(x, a2, b2, w_bf16, bsub)
    out = jax.block_until_ready(out)

    ref = _reference(x, a2, b2, w, bsub)
    assert out.shape == (B, S, D)
    # Tolerance relaxed vs. the f32 reference: bf16 MXU inputs + approximate
    # reciprocal introduce ~1e-3 absolute error on these magnitudes.
    assert jnp.allclose(out, ref, atol=1e-2, rtol=1e-2), "mismatch vs reference"

    print("KERNEL_OK")
</pallas_src>

<mosaic_0001>
module attributes {stable_mosaic.version = 11 : i64} {
  func.func @sublayer_connection_kernel(%arg0: i32, %arg1: memref<16x128xf32, #tpu.memory_space<vmem>>, %arg2: memref<1x128xf32, #tpu.memory_space<vmem>>, %arg3: memref<1x128xf32, #tpu.memory_space<vmem>>, %arg4: memref<128x128xbf16, #tpu.memory_space<vmem>>, %arg5: memref<1x128xf32, #tpu.memory_space<vmem>>, %arg6: memref<16x128xf32, #tpu.memory_space<vmem>>) attributes {dimension_semantics = [#tpu.dimension_semantics<parallel>], iteration_bounds = array<i64: 1>, scalar_prefetch = 0 : i64, scratch_operands = 0 : i64, tpu.core_type = #tpu.core_type<tc>, window_params = [{transform_indices = @transform_0, window_bounds = array<i64: 16, 128>}, {pipeline_mode = #tpu.pipeline_mode<synchronous>, transform_indices = @transform_1, window_bounds = array<i64: 1, 128>}, {pipeline_mode = #tpu.pipeline_mode<synchronous>, transform_indices = @transform_2, window_bounds = array<i64: 1, 128>}, {pipeline_mode = #tpu.pipeline_mode<synchronous>, transform_indices = @transform_3, window_bounds = array<i64: 128, 128>}, {pipeline_mode = #tpu.pipeline_mode<synchronous>, transform_indices = @transform_4, window_bounds = array<i64: 1, 128>}, {transform_indices = @transform_5, window_bounds = array<i64: 16, 128>}]} {
    %c0 = arith.constant 0 : index
    %c0_0 = arith.constant 0 : index
    %0 = vector.load %arg1[%c0, %c0_0] : memref<16x128xf32, #tpu.memory_space<vmem>>, vector<16x128xf32>
    %c0_1 = arith.constant 0 : index
    %c0_2 = arith.constant 0 : index
    %1 = vector.load %arg2[%c0_1, %c0_2] : memref<1x128xf32, #tpu.memory_space<vmem>>, vector<1x128xf32>
    %c0_3 = arith.constant 0 : index
    %c0_4 = arith.constant 0 : index
    %2 = vector.load %arg3[%c0_3, %c0_4] : memref<1x128xf32, #tpu.memory_space<vmem>>, vector<1x128xf32>
    %c0_5 = arith.constant 0 : index
    %c0_6 = arith.constant 0 : index
    %3 = vector.load %arg5[%c0_5, %c0_6] : memref<1x128xf32, #tpu.memory_space<vmem>>, vector<1x128xf32>
    %cst = arith.constant dense<0.000000e+00> : vector<16xf32>
    %4 = vector.multi_reduction <add>, %0, %cst [1] : vector<16x128xf32> to vector<16xf32>
    %5 = vector.shape_cast %4 : vector<16xf32> to vector<16x1xf32>
    %cst_7 = arith.constant 7.812500e-03 : f32
    %6 = vector.broadcast %cst_7 : f32 to vector<16x1xf32>
    %7 = arith.mulf %5, %6 : vector<16x1xf32>
    %8 = vector.broadcast %7 : vector<16x1xf32> to vector<16x128xf32>
    %9 = arith.subf %0, %8 : vector<16x128xf32>
    %10 = arith.mulf %9, %9 : vector<16x128xf32>
    %cst_8 = arith.constant dense<0.000000e+00> : vector<16xf32>
    %11 = vector.multi_reduction <add>, %10, %cst_8 [1] : vector<16x128xf32> to vector<16xf32>
    %12 = vector.shape_cast %11 : vector<16xf32> to vector<16x1xf32>
    %cst_9 = arith.constant 0.00787401571 : f32
    %13 = vector.broadcast %cst_9 : f32 to vector<16x1xf32>
    %14 = arith.mulf %12, %13 : vector<16x1xf32>
    %15 = math.sqrt %14 : vector<16x1xf32>
    %cst_10 = arith.constant 9.99999997E-7 : f32
    %16 = vector.broadcast %cst_10 : f32 to vector<16x1xf32>
    %17 = arith.addf %15, %16 : vector<16x1xf32>
    %18 = tpu.reciprocal %17 {approx = true} : vector<16x1xf32> -> vector<16x1xf32>
    %19 = vector.broadcast %18 : vector<16x1xf32> to vector<16x128xf32>
    %20 = arith.mulf %9, %19 : vector<16x128xf32>
    %21 = vector.broadcast %1 : vector<1x128xf32> to vector<16x128xf32>
    %22 = arith.mulf %20, %21 : vector<16x128xf32>
    %23 = vector.broadcast %2 : vector<1x128xf32> to vector<16x128xf32>
    %24 = arith.addf %22, %23 : vector<16x128xf32>
    %25 = arith.truncf %24 : vector<16x128xf32> to vector<16x128xbf16>
    %c0_11 = arith.constant 0 : index
    %c0_12 = arith.constant 0 : index
    %26 = vector.load %arg4[%c0_11, %c0_12] : memref<128x128xbf16, #tpu.memory_space<vmem>>, vector<128x128xbf16>
    %cst_13 = arith.constant dense<0.000000e+00> : vector<16x128xf32>
    %27 = tpu.matmul %25, %26, %cst_13 {dimension_numbers = #tpu.dot_dimension_numbers<[1], [0], [0], [1], [0, 0, 1, 1], [], []>} : vector<16x128xbf16>, vector<128x128xbf16>, vector<16x128xf32> -> vector<16x128xf32>
    %28 = vector.broadcast %3 : vector<1x128xf32> to vector<16x128xf32>
    %29 = arith.addf %27, %28 : vector<16x128xf32>
    %c0_14 = arith.constant 0 : index
    %c0_15 = arith.constant 0 : index
    %30 = vector.load %arg1[%c0_14, %c0_15] : memref<16x128xf32, #tpu.memory_space<vmem>>, vector<16x128xf32>
    %31 = arith.addf %30, %29 : vector<16x128xf32>
    %c0_16 = arith.constant 0 : index
    %c0_17 = arith.constant 0 : index
    %32 = vector.load %arg6[%c0_16, %c0_17] : memref<16x128xf32, #tpu.memory_space<vmem>>, vector<16x128xf32>
    tpu.vector_store %arg6[%c0_16, %c0_17], %31 {strides = array<i32>} : memref<16x128xf32, #tpu.memory_space<vmem>>, vector<16x128xf32>,
    return
  }
  func.func @transform_0(%arg0: i32) -> (i32, i32) {
    %c0_i32 = arith.constant 0 : i32
    %c0_i32_0 = arith.constant 0 : i32
    return %arg0, %c0_i32 : i32, i32
  }
  func.func @transform_1(%arg0: i32) -> (i32, i32) {
    %c0_i32 = arith.constant 0 : i32
    %c0_i32_0 = arith.constant 0 : i32
    %c0_i32_1 = arith.constant 0 : i32
    return %c0_i32, %c0_i32_0 : i32, i32
  }
  func.func @transform_2(%arg0: i32) -> (i32, i32) {
    %c0_i32 = arith.constant 0 : i32
    %c0_i32_0 = arith.constant 0 : i32
    %c0_i32_1 = arith.constant 0 : i32
    return %c0_i32, %c0_i32_0 : i32, i32
  }
  func.func @transform_3(%arg0: i32) -> (i32, i32) {
    %c0_i32 = arith.constant 0 : i32
    %c0_i32_0 = arith.constant 0 : i32
    %c0_i32_1 = arith.constant 0 : i32
    return %c0_i32, %c0_i32_0 : i32, i32
  }
  func.func @transform_4(%arg0: i32) -> (i32, i32) {
    %c0_i32 = arith.constant 0 : i32
    %c0_i32_0 = arith.constant 0 : i32
    %c0_i32_1 = arith.constant 0 : i32
    return %c0_i32, %c0_i32_0 : i32, i32
  }
  func.func @transform_5(%arg0: i32) -> (i32, i32) {
    %c0_i32 = arith.constant 0 : i32
    %c0_i32_0 = arith.constant 0 : i32
    return %arg0, %c0_i32 : i32, i32
  }
}

</mosaic_0001>

<llo_original>
// kernel: tpu_custom_call.1
$region0: #{tpu_custom_call.1}
  #allocation0 [shape = 'u32[]', space=smem, size = 0x4, offset = 0x4, fixed_abs, tag = 'smem constant byte address 0x4 - core index']
  #allocation1 [shape = 'u32[144,128]{1,0:T(1,128)}', space=vmem, size = 0x12000, scoped, tag = 'internal scratch']
  %s0 = inlined_call_operand.hbm [shape: f32[16,128], index: 0, kind: input, shape index: {}]
  %s1 = inlined_call_operand.vmem [shape: f32[1,128], index: 1, kind: input, shape index: {}]
  %s2 = inlined_call_operand.vmem [shape: f32[1,128], index: 2, kind: input, shape index: {}]
  %s3 = inlined_call_operand.hbm [shape: bf16[128,128], index: 3, kind: input, shape index: {}]
  %s4 = inlined_call_operand.vmem [shape: f32[1,128], index: 4, kind: input, shape index: {}]
  %s5 = inlined_call_operand.hbm [shape: f32[16,128], index: 5, kind: output, shape index: {}]
  %s6 = sld [smem:[#allocation0]]
  $region38: #{tpu_custom_call.1} parent=0
    _
  %s8 = ssub.s32 1, %s6
  %s9 = scalar_select 0, %s8, %s6
  $region1: #{tpu_custom_call.1} parent=0
    #allocation2 [shape = 'u8[8192]{0}', space=vmem, size = 0x2000, scoped, tag = 'input window, operand 0, single buffered']
    #allocation3 [shape = 's32[1]{0}', space=sflag, size = 0x4, scoped, tag = 'scoped memory for tpu_custom_call.1']
    #allocation4 [shape = 's32[1]{0}', space=sflag, size = 0x4, scoped, tag = 'scoped memory for tpu_custom_call.1']
    #allocation5 [shape = 'u8[32768]{0}', space=vmem, size = 0x8000, scoped, tag = 'input window, operand 3, single buffered']
    #allocation6 [shape = 's32[1]{0}', space=sflag, size = 0x4, scoped, tag = 'scoped memory for tpu_custom_call.1']
    #allocation7 [shape = 'u8[8192]{0}', space=vmem, size = 0x2000, scoped, tag = 'output window, operand 0, single buffered']
    %10 = vsyncpa [#allocation3], 0
    %11 = vsyncpa [#allocation6], 0
    %12 = vsyncpa [#allocation4], 0
    // Predicated region
    $region2: #{tpu_custom_call.1} parent=1 // pred_check
      _
    $region3: #{tpu_custom_call.1} parent=1 // pred_check_branch
      %14 = sbr.rel (0) target = $region5
    $region4: #{tpu_custom_call.1} parent=1 // pred_region
      %s16 = ssub.s32 256, 256
      %17 = vsyncadd [#allocation3], %s16
      %s18 = sshll.u32 [#allocation2], 4
      %s19 = int_to_ptr.vmem [resolvable:$true] %s18
      %24 = dma.hbm_to_vmem [thread:$0]  %s0, 256, %s19, [#allocation3], 128, 128, 8
    $region5: #{tpu_custom_call.1} parent=1 // pred_fallthru
      _
    // Predicated region
    $region6: #{tpu_custom_call.1} parent=1 // pred_check
      _
    $region7: #{tpu_custom_call.1} parent=1 // pred_check_branch
      %26 = sbr.rel (0) target = $region9
    $region8: #{tpu_custom_call.1} parent=1 // pred_region
      _
    $region9: #{tpu_custom_call.1} parent=1 // pred_fallthru
      _
    // Predicated region
    $region10: #{tpu_custom_call.1} parent=1 // pred_check
      _
    $region11: #{tpu_custom_call.1} parent=1 // pred_check_branch
      %28 = sbr.rel (0) target = $region13
    $region12: #{tpu_custom_call.1} parent=1 // pred_region
      _
    $region13: #{tpu_custom_call.1} parent=1 // pred_fallthru
      _
    // Predicated region
    $region14: #{tpu_custom_call.1} parent=1 // pred_check
      _
    $region15: #{tpu_custom_call.1} parent=1 // pred_check_branch
      %30 = sbr.rel (0) target = $region17
    $region16: #{tpu_custom_call.1} parent=1 // pred_region
      %s32 = ssub.s32 1024, 1024
      %33 = vsyncadd [#allocation6], %s32
      %s34 = sshll.u32 [#allocation5], 4
      %s35 = int_to_ptr.vmem [resolvable:$true] %s34
      %40 = dma.hbm_to_vmem [thread:$0]  %s3, 1024, %s35, [#allocation6], 64, 64, 4
    $region17: #{tpu_custom_call.1} parent=1 // pred_fallthru
      _
    // Predicated region
    $region18: #{tpu_custom_call.1} parent=1 // pred_check
      _
    $region19: #{tpu_custom_call.1} parent=1 // pred_check_branch
      %42 = sbr.rel (0) target = $region21
    $region20: #{tpu_custom_call.1} parent=1 // pred_region
      _
    $region21: #{tpu_custom_call.1} parent=1 // pred_fallthru
      _
    // Predicated region
    $region22: #{tpu_custom_call.1} parent=1 // pred_check
      _
    $region23: #{tpu_custom_call.1} parent=1 // pred_check_branch
      %44 = sbr.rel (0) target = $region25
    $region24: #{tpu_custom_call.1} parent=1 // pred_region
      %45 = dma.done [#allocation3], 256
    $region25: #{tpu_custom_call.1} parent=1 // pred_fallthru
      _
    // Predicated region
    $region26: #{tpu_custom_call.1} parent=1 // pred_check
      _
    $region27: #{tpu_custom_call.1} parent=1 // pred_check_branch
      %47 = sbr.rel (0) target = $region29
    $region28: #{tpu_custom_call.1} parent=1 // pred_region
      %48 = dma.done [#allocation6], 1024
    $region29: #{tpu_custom_call.1} parent=1 // pred_fallthru
      _
    %v50 = vld [vmem:[#allocation2] sm:$0xff]
    %v51 = vld [vmem:[#allocation2 + $0x8] sm:$0xff]
    %v52 = vld [vmem:[%s1] sm:$0x1]
    %v53 = vld [vmem:[%s2] sm:$0x1]
    %v54 = vld [vmem:[%s4] sm:$0x1]
    %55 = vadd.xlane.f32.xlu0 %v50
    %v56 = vpop.xlane.xlu0 %55
    %57 = vadd.xlane.f32.xlu0 %v51
    %v58 = vpop.xlane.xlu0 %57
    %v59 = vmul.f32 %v56, 0.0078125
    %v60 = vmul.f32 %v58, 0.0078125
    %v61 = vsub.f32 %v50, %v59
    %v62 = vsub.f32 %v51, %v60
    %v63 = vmul.f32 %v61, %v61
    %v64 = vmul.f32 %v62, %v62
    %65 = vadd.xlane.f32.xlu0 %v63
    %v66 = vpop.xlane.xlu0 %65
    %67 = vadd.xlane.f32.xlu0 %v64
    %v68 = vpop.xlane.xlu0 %67
    %v69 = vmul.f32 %v66, 0.007874016
    %v70 = vmul.f32 %v68, 0.007874016
    %v71 = vrsqrt.pop %v69
    %v72 = vmul.f32 %v69, %v71
    %vm73 = vcmp.eq.f32.partialorder %v69, inf
    %v74 = vsel %vm73, %v69, %v72
    %vm75 = vcmp.eq.f32.partialorder %v69, 0.0
    %v76 = vand.u32 %v69, 2147483648
    %v77 = vsel %vm75, %v76, %v74
    %v78 = vrsqrt.pop %v70
    %v79 = vmul.f32 %v70, %v78
    %vm80 = vcmp.eq.f32.partialorder %v70, inf
    %v81 = vsel %vm80, %v70, %v79
    %vm82 = vcmp.eq.f32.partialorder %v70, 0.0
    %v83 = vand.u32 %v70, 2147483648
    %v84 = vsel %vm82, %v83, %v81
    %v85 = vadd.f32 %v77, 1e-06
    %v86 = vadd.f32 %v84, 1e-06
    %v87 = vrcp.pop %v85
    %v88 = vrcp.pop %v86
    %v89 = vmul.f32 %v61, %v87
    %v90 = vmul.f32 %v62, %v88
    %v92 = vlaneseq
    %v93 = vshrl.u32 %v92, 7
    %v94 = vsub.s32 0, %v93
    %v95 = vrot.slane %v52, %v94
    %v97 = vmul.f32 %v89, %v95
    %v98 = vmul.f32 %v90, %v95
    %v100 = vlaneseq
    %v101 = vshrl.u32 %v100, 7
    %v102 = vsub.s32 0, %v101
    %v103 = vrot.slane %v53, %v102
    %v105 = vadd.f32 %v97, %v103
    %v106 = vadd.f32 %v98, %v103
    %v107 = vpack.c.bf16 %v106, %v105
    %v108 = vld [vmem:[#allocation5] sm:$0xf]
    %v109 = vld [vmem:[#allocation5 + $0x4] sm:$0xf]
    %v110 = vld [vmem:[#allocation5 + $0x8] sm:$0xf]
    %v111 = vld [vmem:[#allocation5 + $0xc] sm:$0xf]
    %v112 = vld [vmem:[#allocation5 + $0x10] sm:$0xf]
    %v113 = vld [vmem:[#allocation5 + $0x14] sm:$0xf]
    %v114 = vld [vmem:[#allocation5 + $0x18] sm:$0xf]
    %v115 = vld [vmem:[#allocation5 + $0x1c] sm:$0xf]
    %v116 = vld [vmem:[#allocation5 + $0x20] sm:$0xf]
    %v117 = vld [vmem:[#allocation5 + $0x24] sm:$0xf]
    %v118 = vld [vmem:[#allocation5 + $0x28] sm:$0xf]
    %v119 = vld [vmem:[#allocation5 + $0x2c] sm:$0xf]
    %v120 = vld [vmem:[#allocation5 + $0x30] sm:$0xf]
    %v121 = vld [vmem:[#allocation5 + $0x34] sm:$0xf]
    %v122 = vld [vmem:[#allocation5 + $0x38] sm:$0xf]
    %v123 = vld [vmem:[#allocation5 + $0x3c] sm:$0xf]
    %v125 = vlaneseq
    %v126 = vshrl.u32 %v125, 7
    %v127 = vsub.s32 0, %v126
    %v128 = vrot.slane %v54, %v127
    %v146 = vunpack.c.l.b16 %v108
    %v147 = vunpack.c.l.b16 %v109
    %v148 = vunpack.c.l.b16 %v110
    %v149 = vunpack.c.l.b16 %v111
    %v150 = vunpack.c.l.b16 %v112
    %v151 = vunpack.c.l.b16 %v113
    %v152 = vunpack.c.l.b16 %v114
    %v153 = vunpack.c.l.b16 %v115
    %v154 = vunpack.c.l.b16 %v116
    %v155 = vunpack.c.l.b16 %v117
    %v156 = vunpack.c.l.b16 %v118
    %v157 = vunpack.c.l.b16 %v119
    %v158 = vunpack.c.l.b16 %v120
    %v159 = vunpack.c.l.b16 %v121
    %v160 = vunpack.c.l.b16 %v122
    %v161 = vunpack.c.l.b16 %v123
    %v162 = vpack.c.b16 %v147, %v146
    %v163 = vpack.c.b16 %v149, %v148
    %v164 = vpack.c.b16 %v151, %v150
    %v165 = vpack.c.b16 %v153, %v152
    %v166 = vpack.c.b16 %v155, %v154
    %v167 = vpack.c.b16 %v157, %v156
    %v168 = vpack.c.b16 %v159, %v158
    %v169 = vpack.c.b16 %v161, %v160
    %178 = vmatprep.subr.bf16.mxu0 0
    %179 = vmatpush1.bf16.msra.mxu0 %v162
    %180 = vmatprep.subr.bf16.mxu0 0
    %181 = vmatpush1.bf16.msra.mxu0 %v163
    %182 = vmatprep.subr.bf16.mxu0 0
    %183 = vmatpush1.bf16.msra.mxu0 %v164
    %184 = vmatprep.subr.bf16.mxu0 0
    %185 = vmatpush1.bf16.msra.mxu0 %v165
    %186 = vmatprep.subr.bf16.mxu0 0
    %187 = vmatpush1.bf16.msra.mxu0 %v166
    %188 = vmatprep.subr.bf16.mxu0 0
    %189 = vmatpush1.bf16.msra.mxu0 %v167
    %190 = vmatprep.subr.bf16.mxu0 0
    %191 = vmatpush1.bf16.msra.mxu0 %v168
    %192 = vmatprep.subr.bf16.mxu0 0
    %193 = vmatpush1.bf16.msra.mxu0 %v169
    %194 = vmatprep.subr.bf16.mxu0 0
    %195 = vmatpush1.bf16.msra.mxu0 0
    %196 = vmatprep.subr.bf16.mxu0 0
    %197 = vmatpush1.bf16.msra.mxu0 0
    %198 = vmatprep.subr.bf16.mxu0 0
    %199 = vmatpush1.bf16.msra.mxu0 0
    %200 = vmatprep.subr.bf16.mxu0 0
    %201 = vmatpush1.bf16.msra.mxu0 0
    %202 = vmatprep.subr.bf16.mxu0 0
    %203 = vmatpush1.bf16.msra.mxu0 0
    %204 = vmatprep.subr.bf16.mxu0 0
    %205 = vmatpush1.bf16.msra.mxu0 0
    %206 = vmatprep.subr.bf16.mxu0 0
    %207 = vmatpush1.bf16.msra.mxu0 0
    %208 = vmatprep.subr.bf16.mxu0 0
    %209 = vmatpush1.bf16.msra.mxu0 0
    %210 = vmatprep.mubr.bf16.mxu0 0
    %211 = vmatmul.mubr.bf16.gmra.mrb[0].mxu0 %v107
    %v212 = vpop.f32.mrb[0].mxu0
    %v213 = vadd.f32 %v128, %v212
    %v214 = vpop.f32.mrb[0].mxu0
    %v215 = vpop.f32.mrb[0].mxu0
    %v216 = vadd.f32 %v128, %v215
    %v217 = vpop.f32.mrb[0].mxu0
    %218 = vdwg.mxu0
    %v219 = vadd.f32 %v50, %v213
    %v220 = vadd.f32 %v51, %v216
    %221 = vst [vmem:[#allocation7] sm:$0xff] %v219
    %222 = vst [vmem:[#allocation7 + $0x8] sm:$0xff] %v220
    // Predicated region
    $region30: #{tpu_custom_call.1} parent=1 // pred_check
      _
    $region31: #{tpu_custom_call.1} parent=1 // pred_check_branch
      %224 = sbr.rel (0) target = $region33
    $region32: #{tpu_custom_call.1} parent=1 // pred_region
      %s226 = ssub.s32 256, 256
      %227 = vsyncadd [#allocation4], %s226
      %s228 = sshll.u32 [#allocation7], 4
      %s229 = int_to_ptr.vmem [resolvable:$true] %s228
      %234 = dma.vmem_to_hbm [thread:$0]  %s229, 256, %s5, [#allocation4], 128, 128, 8
    $region33: #{tpu_custom_call.1} parent=1 // pred_fallthru
      _
    // Predicated region
    $region34: #{tpu_custom_call.1} parent=1 // pred_check
      _
    $region35: #{tpu_custom_call.1} parent=1 // pred_check_branch
      %236 = sbr.rel (0) target = $region37
    $region36: #{tpu_custom_call.1} parent=1 // pred_region
      %237 = dma.done [#allocation4], 256
    $region37: #{tpu_custom_call.1} parent=1 // pred_fallthru
      _
    %238 = vsyncpa [#allocation3], 1
    %239 = vsyncpa [#allocation6], 1
    %240 = vsyncpa [#allocation4], 1

</llo_original>
